<compile_context>
chip_gen: v6e
topology: v6e:2x2x1
jax: 0.10.0
libtpu: 0.0.40
codegen_flags: <defaults>
</compile_context>

<pallas_src>
import jax
import jax.numpy as jnp
from jax.experimental import pallas as pl
from jax.experimental.pallas import tpu as pltpu  # noqa: F401  (TPU backend)

# cfg-equivalent constants (synthetic, small)
WORD_DIM = 32      # cfg.WORD_DIM (cdf)
A_DIM = 8          # cfg.A_DIM
CHANNELS = 4       # idf
RES = 16           # ih = iw
SOURCE_L = 8       # sourceL (word sequence length)
BATCH = 2


def global_attention_kernel(x_ref, ctxT_ref, w_proj_ref, w_fc_pack_ref, out_ref):
    """Single invocation, all batch elements processed in one body.

    x_ref        : (B, idf, queryL)    flattened NCHW inputs
    ctxT_ref     : (B*sourceL, cdf)    context, batch/seq flattened, channels last
    w_proj_ref   : (cdf, idf+1)        [w_ctx^T | w_ctx^T @ w_conv^T]
    w_fc_pack_ref: (queryL+1, a_dim)   [w_fc^T ; b_fc]
    out_ref      : (B, a_dim)
    """
    B, idf, queryL = x_ref.shape
    sourceL = ctxT_ref.shape[0] // B

    # One MXU push projects the context of ALL batch elements and simultaneously
    # produces the w_conv-folded column (last col) -- replaces B small per-batch
    # projections plus a separate (1, cdf) @ (cdf, sourceL) matmul.
    proj = jnp.dot(ctxT_ref[...], w_proj_ref[...],
                   preferred_element_type=jnp.float32)          # (B*sourceL, idf+1)

    rows = []
    for b in range(B):                                          # tiny static B -> unrolled
        s_b = proj[b * sourceL:(b + 1) * sourceL, 0:idf]        # (sourceL, idf)  = sourceT^T
        c_b = proj[b * sourceL:(b + 1) * sourceL, idf:idf + 1]  # (sourceL, 1)    = w_conv @ sourceT
        x_b = x_ref[b]                                          # (idf, queryL)

        # Attention logits, queryL on the lane axis: (sourceL, queryL).
        attnT = jnp.dot(s_b, x_b, preferred_element_type=jnp.float32)

        # Softmax over sourceL (sublane axis) with deferred normalization.
        # TODO(synk): applyMask (masked_fill with -inf before softmax) is not
        # implemented; the wrapper rejects non-None masks.
        e = jnp.exp(attnT - jnp.max(attnT, axis=0, keepdims=True))
        denom = jnp.sum(e, axis=0, keepdims=True)               # (1, queryL)
        # w_conv @ weightedContext collapses to a sublane-weighted reduce of e.
        num = jnp.sum(c_b * e, axis=0, keepdims=True)           # (1, queryL)
        # approx=True would use the cheaper EUP approximation; kept exact to
        # hold 1e-4 parity with the PyTorch reference.
        rows.append(num * pl.reciprocal(denom, approx=False))

    flat = jnp.concatenate(rows, axis=0)                        # (B, queryL)

    # Single att_fc matmul for the whole batch + broadcast bias, single store.
    w_all = w_fc_pack_ref[...]                                  # (queryL+1, a_dim)
    out = jnp.dot(flat, w_all[0:queryL, :],
                  preferred_element_type=jnp.float32) + w_all[queryL:queryL + 1, :]
    out_ref[...] = out.astype(out_ref.dtype)


def global_attention(inputs, context, w_ctx, w_conv, w_fc, b_fc, mask=None):
    """inputs: (B, idf, ih, iw), context: (B, cdf, sourceL) -> (B, a_dim)."""
    if mask is not None:
        # API restriction: masked attention (applyMask) is not supported.
        raise NotImplementedError(
            "GlobalAttentionGeneral Pallas kernel does not support a non-None mask.")

    B, idf, ih, iw = inputs.shape
    queryL = ih * iw
    _, cdf, sourceL = context.shape
    a_dim = w_fc.shape[0]
    f32 = jnp.float32

    x = inputs.reshape(B, idf, queryL).astype(f32)
    # Channels-last, batch/seq flattened: plain (M,K)@(K,N) matmuls in-kernel.
    ctxT = jnp.transpose(context, (0, 2, 1)).reshape(B * sourceL, cdf).astype(f32)

    # Host-side static-weight packing (free, correctness-preserving):
    w_ctxT = jnp.transpose(w_ctx).astype(f32)                      # (cdf, idf)
    w_cv_col = w_ctxT @ jnp.transpose(w_conv).astype(f32)          # (cdf, 1) folds idf->1 conv
    w_proj = jnp.concatenate([w_ctxT, w_cv_col], axis=1)           # (cdf, idf+1)
    w_fc_pack = jnp.concatenate(
        [jnp.transpose(w_fc).astype(f32), b_fc.reshape(1, a_dim).astype(f32)],
        axis=0)                                                    # (queryL+1, a_dim)

    # Advisory cost hint for XLA scheduling around the tiny custom call.
    flops = (2 * B * sourceL * cdf * (idf + 1)        # packed context projection
             + 2 * B * sourceL * idf * queryL         # attention logits
             + 8 * B * sourceL * queryL               # softmax + weighted reduce
             + 2 * B * queryL * a_dim)                # att_fc
    bytes_accessed = 4 * (x.size + ctxT.size + w_proj.size + w_fc_pack.size + B * a_dim)
    cost = pl.CostEstimate(flops=int(flops),
                           transcendentals=int(B * sourceL * queryL),
                           bytes_accessed=int(bytes_accessed))

    # Whole problem (<20 KiB) fits in VMEM: one invocation, no grid, whole-array
    # blocks (no per-step pipeline setup / double-buffering of tiny weights).
    # If B or RES is ever scaled up, switch to a ("parallel",) batch grid (2 TCs
    # on v7x) and 128-multiple queryL tiles sized for the 64 MiB v7x VMEM.
    return pl.pallas_call(
        global_attention_kernel,
        out_shape=jax.ShapeDtypeStruct((B, a_dim), f32),
        cost_estimate=cost,
    )(x, ctxT, w_proj, w_fc_pack)


def reference(inputs, context, w_ctx, w_conv, w_fc, b_fc):
    """Pure-JAX re-implementation of the PyTorch forward for validation."""
    B, idf, ih, iw = inputs.shape
    queryL = ih * iw
    x = inputs.reshape(B, idf, queryL).astype(jnp.float32)
    sourceT = jnp.einsum('ic,bcl->bil', w_ctx, context.astype(jnp.float32))
    attn = jnp.einsum('biq,bil->bql', x, sourceT)
    attn = jax.nn.softmax(attn, axis=-1)
    wc = jnp.einsum('bil,bql->biq', sourceT, attn)
    flat = jnp.einsum('oi,biq->boq', w_conv, wc).reshape(B, queryL)
    return flat @ w_fc.T + b_fc.reshape(-1)


if __name__ == "__main__":
    key = jax.random.PRNGKey(0)
    k_in, k_ctx, k_wc, k_conv, k_fc, k_b = jax.random.split(key, 6)

    inputs = jax.random.normal(k_in, (BATCH, CHANNELS, RES, RES), jnp.float32)
    context = jax.random.normal(k_ctx, (BATCH, WORD_DIM, SOURCE_L), jnp.float32)

    # Deterministic synthetic parameters (shapes match the nn.Module __init__)
    w_ctx = jax.random.normal(k_wc, (CHANNELS, WORD_DIM), jnp.float32) * 0.05
    w_conv = jax.random.normal(k_conv, (1, CHANNELS), jnp.float32) * 0.05
    w_fc = jax.random.normal(k_fc, (A_DIM, RES * RES), jnp.float32) * 0.05
    b_fc = jax.random.normal(k_b, (1, A_DIM), jnp.float32) * 0.05

    out = global_attention(inputs, context, w_ctx, w_conv, w_fc, b_fc)
    out = jax.block_until_ready(out)

    ref = reference(inputs, context, w_ctx, w_conv, w_fc, b_fc)
    assert out.shape == (BATCH, A_DIM), out.shape
    assert jnp.allclose(out, ref, atol=1e-4, rtol=1e-4), (out, ref)

    print("KERNEL_OK")
</pallas_src>

<mosaic_0001>
module attributes {stable_mosaic.version = 11 : i64} {
  func.func @global_attention_kernel(%arg0: memref<2x4x256xf32, #tpu.memory_space<vmem>>, %arg1: memref<16x32xf32, #tpu.memory_space<vmem>>, %arg2: memref<32x5xf32, #tpu.memory_space<vmem>>, %arg3: memref<257x8xf32, #tpu.memory_space<vmem>>, %arg4: memref<2x8xf32, #tpu.memory_space<vmem>>) attributes {dimension_semantics = [], scalar_prefetch = 0 : i64, scratch_operands = 0 : i64, tpu.core_type = #tpu.core_type<tc>} {
    %c0 = arith.constant 0 : index
    %c0_0 = arith.constant 0 : index
    %0 = vector.load %arg1[%c0, %c0_0] : memref<16x32xf32, #tpu.memory_space<vmem>>, vector<16x32xf32>
    %c0_1 = arith.constant 0 : index
    %c0_2 = arith.constant 0 : index
    %1 = vector.load %arg2[%c0_1, %c0_2] : memref<32x5xf32, #tpu.memory_space<vmem>>, vector<32x5xf32>
    %cst = arith.constant dense<0.000000e+00> : vector<16x5xf32>
    %2 = tpu.matmul %0, %1, %cst {dimension_numbers = #tpu.dot_dimension_numbers<[1], [0], [0], [1], [0, 0, 1, 1], [], []>} : vector<16x32xf32>, vector<32x5xf32>, vector<16x5xf32> -> vector<16x5xf32>
    %3 = vector.extract_strided_slice %2 {offsets = [0, 0], sizes = [8, 4], strides = [1, 1]} : vector<16x5xf32> to vector<8x4xf32>
    %4 = vector.extract_strided_slice %2 {offsets = [0, 4], sizes = [8, 1], strides = [1, 1]} : vector<16x5xf32> to vector<8x1xf32>
    %c0_3 = arith.constant 0 : index
    %c0_4 = arith.constant 0 : index
    %c0_5 = arith.constant 0 : index
    %5 = vector.load %arg0[%c0_3, %c0_4, %c0_5] : memref<2x4x256xf32, #tpu.memory_space<vmem>>, vector<1x4x256xf32>
    %6 = vector.shape_cast %5 : vector<1x4x256xf32> to vector<4x256xf32>
    %cst_6 = arith.constant dense<0.000000e+00> : vector<8x256xf32>
    %7 = tpu.matmul %3, %6, %cst_6 {dimension_numbers = #tpu.dot_dimension_numbers<[1], [0], [0], [1], [0, 0, 1, 1], [], []>} : vector<8x4xf32>, vector<4x256xf32>, vector<8x256xf32> -> vector<8x256xf32>
    %cst_7 = arith.constant dense<0xFF800000> : vector<256xf32>
    %8 = vector.multi_reduction <maximumf>, %7, %cst_7 [0] : vector<8x256xf32> to vector<256xf32>
    %9 = vector.shape_cast %8 : vector<256xf32> to vector<1x256xf32>
    %10 = vector.broadcast %9 : vector<1x256xf32> to vector<8x256xf32>
    %11 = arith.subf %7, %10 : vector<8x256xf32>
    %12 = math.exp %11 : vector<8x256xf32>
    %cst_8 = arith.constant dense<0.000000e+00> : vector<256xf32>
    %13 = vector.multi_reduction <add>, %12, %cst_8 [0] : vector<8x256xf32> to vector<256xf32>
    %14 = vector.shape_cast %13 : vector<256xf32> to vector<1x256xf32>
    %15 = vector.broadcast %4 : vector<8x1xf32> to vector<8x256xf32>
    %16 = arith.mulf %15, %12 : vector<8x256xf32>
    %cst_9 = arith.constant dense<0.000000e+00> : vector<256xf32>
    %17 = vector.multi_reduction <add>, %16, %cst_9 [0] : vector<8x256xf32> to vector<256xf32>
    %18 = vector.shape_cast %17 : vector<256xf32> to vector<1x256xf32>
    %19 = tpu.reciprocal %14 : vector<1x256xf32> -> vector<1x256xf32>
    %20 = arith.mulf %18, %19 : vector<1x256xf32>
    %21 = vector.extract_strided_slice %2 {offsets = [8, 0], sizes = [8, 4], strides = [1, 1]} : vector<16x5xf32> to vector<8x4xf32>
    %22 = vector.extract_strided_slice %2 {offsets = [8, 4], sizes = [8, 1], strides = [1, 1]} : vector<16x5xf32> to vector<8x1xf32>
    %c1 = arith.constant 1 : index
    %c0_10 = arith.constant 0 : index
    %c0_11 = arith.constant 0 : index
    %23 = vector.load %arg0[%c1, %c0_10, %c0_11] : memref<2x4x256xf32, #tpu.memory_space<vmem>>, vector<1x4x256xf32>
    %24 = vector.shape_cast %23 : vector<1x4x256xf32> to vector<4x256xf32>
    %cst_12 = arith.constant dense<0.000000e+00> : vector<8x256xf32>
    %25 = tpu.matmul %21, %24, %cst_12 {dimension_numbers = #tpu.dot_dimension_numbers<[1], [0], [0], [1], [0, 0, 1, 1], [], []>} : vector<8x4xf32>, vector<4x256xf32>, vector<8x256xf32> -> vector<8x256xf32>
    %cst_13 = arith.constant dense<0xFF800000> : vector<256xf32>
    %26 = vector.multi_reduction <maximumf>, %25, %cst_13 [0] : vector<8x256xf32> to vector<256xf32>
    %27 = vector.shape_cast %26 : vector<256xf32> to vector<1x256xf32>
    %28 = vector.broadcast %27 : vector<1x256xf32> to vector<8x256xf32>
    %29 = arith.subf %25, %28 : vector<8x256xf32>
    %30 = math.exp %29 : vector<8x256xf32>
    %cst_14 = arith.constant dense<0.000000e+00> : vector<256xf32>
    %31 = vector.multi_reduction <add>, %30, %cst_14 [0] : vector<8x256xf32> to vector<256xf32>
    %32 = vector.shape_cast %31 : vector<256xf32> to vector<1x256xf32>
    %33 = vector.broadcast %22 : vector<8x1xf32> to vector<8x256xf32>
    %34 = arith.mulf %33, %30 : vector<8x256xf32>
    %cst_15 = arith.constant dense<0.000000e+00> : vector<256xf32>
    %35 = vector.multi_reduction <add>, %34, %cst_15 [0] : vector<8x256xf32> to vector<256xf32>
    %36 = vector.shape_cast %35 : vector<256xf32> to vector<1x256xf32>
    %37 = tpu.reciprocal %32 : vector<1x256xf32> -> vector<1x256xf32>
    %38 = arith.mulf %36, %37 : vector<1x256xf32>
    %39 = tpu.concatenate %20, %38 in 0 : vector<1x256xf32>, vector<1x256xf32> -> vector<2x256xf32>
    %c0_16 = arith.constant 0 : index
    %c0_17 = arith.constant 0 : index
    %40 = vector.load %arg3[%c0_16, %c0_17] : memref<257x8xf32, #tpu.memory_space<vmem>>, vector<257x8xf32>
    %41 = vector.extract_strided_slice %40 {offsets = [0, 0], sizes = [256, 8], strides = [1, 1]} : vector<257x8xf32> to vector<256x8xf32>
    %cst_18 = arith.constant dense<0.000000e+00> : vector<2x8xf32>
    %42 = tpu.matmul %39, %41, %cst_18 {dimension_numbers = #tpu.dot_dimension_numbers<[1], [0], [0], [1], [0, 0, 1, 1], [], []>} : vector<2x256xf32>, vector<256x8xf32>, vector<2x8xf32> -> vector<2x8xf32>
    %43 = vector.extract_strided_slice %40 {offsets = [256, 0], sizes = [1, 8], strides = [1, 1]} : vector<257x8xf32> to vector<1x8xf32>
    %44 = vector.broadcast %43 : vector<1x8xf32> to vector<2x8xf32>
    %45 = arith.addf %42, %44 : vector<2x8xf32>
    %c0_19 = arith.constant 0 : index
    %c0_20 = arith.constant 0 : index
    %46 = vector.load %arg4[%c0_19, %c0_20] : memref<2x8xf32, #tpu.memory_space<vmem>>, vector<2x8xf32>
    tpu.vector_store %arg4[%c0_19, %c0_20], %45 {strides = array<i32>} : memref<2x8xf32, #tpu.memory_space<vmem>>, vector<2x8xf32>,
    return
  }
}

</mosaic_0001>

<llo_original>
// kernel: tpu_custom_call.1
$region0: #{tpu_custom_call.1}
  #allocation0 [shape = 'u32[]', space=smem, size = 0x4, offset = 0x4, fixed_abs, tag = 'smem constant byte address 0x4 - core index']
  #allocation1 [shape = 'u32[144,128]{1,0:T(1,128)}', space=vmem, size = 0x12000, scoped, tag = 'internal scratch']
  %s0 = inlined_call_operand.vmem [shape: f32[2,4,256], index: 0, kind: input, shape index: {}]
  %s1 = inlined_call_operand.vmem [shape: f32[16,32], index: 1, kind: input, shape index: {}]
  %s2 = inlined_call_operand.vmem [shape: f32[32,5], index: 2, kind: input, shape index: {}]
  %s3 = inlined_call_operand.vmem [shape: f32[257,8], index: 3, kind: input, shape index: {}]
  %s4 = inlined_call_operand.hbm [shape: f32[2,8], index: 4, kind: output, shape index: {}]
  %s5 = sld [smem:[#allocation0]]
  $region26: #{tpu_custom_call.1} parent=0
    _
  %s7 = ssub.s32 1, %s5
  %s8 = scalar_select 0, %s7, %s5
  $region1: #{tpu_custom_call.1} parent=0
    #allocation2 [shape = 'u8[1024]{0}', space=vmem, size = 0x400, scoped, tag = 'output window, operand 0, single buffered']
    #allocation3 [shape = 's32[1]{0}', space=sflag, size = 0x4, scoped, tag = 'scoped memory for tpu_custom_call.1']
    %9 = vsyncpa [#allocation3], 0
    // Predicated region
    $region2: #{tpu_custom_call.1} parent=1 // pred_check
      _
    $region3: #{tpu_custom_call.1} parent=1 // pred_check_branch
      %11 = sbr.rel (0) target = $region5
    $region4: #{tpu_custom_call.1} parent=1 // pred_region
      _
    $region5: #{tpu_custom_call.1} parent=1 // pred_fallthru
      _
    // Predicated region
    $region6: #{tpu_custom_call.1} parent=1 // pred_check
      _
    $region7: #{tpu_custom_call.1} parent=1 // pred_check_branch
      %13 = sbr.rel (0) target = $region9
    $region8: #{tpu_custom_call.1} parent=1 // pred_region
      _
    $region9: #{tpu_custom_call.1} parent=1 // pred_fallthru
      _
    // Predicated region
    $region10: #{tpu_custom_call.1} parent=1 // pred_check
      _
    $region11: #{tpu_custom_call.1} parent=1 // pred_check_branch
      %15 = sbr.rel (0) target = $region13
    $region12: #{tpu_custom_call.1} parent=1 // pred_region
      _
    $region13: #{tpu_custom_call.1} parent=1 // pred_fallthru
      _
    // Predicated region
    $region14: #{tpu_custom_call.1} parent=1 // pred_check
      _
    $region15: #{tpu_custom_call.1} parent=1 // pred_check_branch
      %17 = sbr.rel (0) target = $region17
    $region16: #{tpu_custom_call.1} parent=1 // pred_region
      _
    $region17: #{tpu_custom_call.1} parent=1 // pred_fallthru
      _
    %v18 = vld [vmem:[%s1] sm:$0xff]
    %v19 = vld [vmem:[%s1 + $0x8] sm:$0xff]
    %v20 = vld [vmem:[%s2] sm:$0xff]
    %v21 = vld [vmem:[%s2 + $0x8] sm:$0xff]
    %v22 = vld [vmem:[%s2 + $0x10] sm:$0xff]
    %v23 = vld [vmem:[%s2 + $0x18] sm:$0xff]
    %vm24 = vcmask 261120
    %v26 = vsel %vm24, %v18, 0
    %v29 = vsel %vm24, %v19, 0
    %31 = vmatprep.subr.mxu0 0.0
    %32 = vmatpush1.msra.mxu0 0.0
    %33 = vmatprep.subr.mxu0 0.0
    %34 = vmatpush1.msra.mxu0 0.0
    %35 = vmatprep.subr.mxu0 0.0
    %36 = vmatpush1.msra.mxu0 0.0
    %37 = vmatprep.subr.mxu0 0.0
    %38 = vmatpush1.msra.mxu0 0.0
    %39 = vmatprep.subr.mxu0 0.0
    %40 = vmatpush1.msra.mxu0 0.0
    %41 = vmatprep.subr.mxu0 0.0
    %42 = vmatpush1.msra.mxu0 0.0
    %43 = vmatprep.subr.mxu0 0.0
    %44 = vmatpush1.msra.mxu0 0.0
    %45 = vmatprep.subr.mxu0 0.0
    %46 = vmatpush1.msra.mxu0 0.0
    %47 = vmatprep.subr.mxu0 0.0
    %48 = vmatpush1.msra.mxu0 0.0
    %49 = vmatprep.subr.mxu0 0.0
    %50 = vmatpush1.msra.mxu0 0.0
    %51 = vmatprep.subr.mxu0 0.0
    %52 = vmatpush1.msra.mxu0 0.0
    %53 = vmatprep.subr.mxu0 0.0
    %54 = vmatpush1.msra.mxu0 0.0
    %55 = vmatprep.subr.mxu0 0.0
    %56 = vmatpush1.msra.mxu0 %v23
    %57 = vmatprep.subr.mxu0 0.0
    %58 = vmatpush1.msra.mxu0 %v22
    %59 = vmatprep.subr.mxu0 0.0
    %60 = vmatpush1.msra.mxu0 %v21
    %61 = vmatprep.subr.mxu0 0.0
    %62 = vmatpush1.msra.mxu0 %v20
    %63 = vmatprep.subr.mxu0 0.0
    %64 = vmatpush2.msra.mxu0 0.0
    %65 = vmatprep.subr.mxu0 0.0
    %66 = vmatpush2.msra.mxu0 0.0
    %67 = vmatprep.subr.mxu0 0.0
    %68 = vmatpush2.msra.mxu0 0.0
    %69 = vmatprep.subr.mxu0 0.0
    %70 = vmatpush2.msra.mxu0 0.0
    %71 = vmatprep.subr.mxu0 0.0
    %72 = vmatpush2.msra.mxu0 0.0
    %73 = vmatprep.subr.mxu0 0.0
    %74 = vmatpush2.msra.mxu0 0.0
    %75 = vmatprep.subr.mxu0 0.0
    %76 = vmatpush2.msra.mxu0 0.0
    %77 = vmatprep.subr.mxu0 0.0
    %78 = vmatpush2.msra.mxu0 0.0
    %79 = vmatprep.subr.mxu0 0.0
    %80 = vmatpush2.msra.mxu0 0.0
    %81 = vmatprep.subr.mxu0 0.0
    %82 = vmatpush2.msra.mxu0 0.0
    %83 = vmatprep.subr.mxu0 0.0
    %84 = vmatpush2.msra.mxu0 0.0
    %85 = vmatprep.subr.mxu0 0.0
    %86 = vmatpush2.msra.mxu0 0.0
    %87 = vmatprep.subr.mxu0 0.0
    %88 = vmatpush2.msra.mxu0 0.0
    %89 = vmatprep.subr.mxu0 0.0
    %90 = vmatpush2.msra.mxu0 0.0
    %91 = vmatprep.subr.mxu0 0.0
    %92 = vmatpush2.msra.mxu0 0.0
    %93 = vmatprep.subr.mxu0 0.0
    %94 = vmatpush2.msra.mxu0 0.0
    %95 = vmatprep.mubr.f32.mxu0 0.0
    %96 = vmatmul.mubr.f32.gmra.mxu0 %v26
    %v97 = vpop.f32.mrf.mxu0
    %v98 = vadd.f32 0.0, %v97
    %v99 = vpop.f32.mrf.mxu0
    %100 = vmatprep.mubr.f32.mxu0 0.0
    %101 = vmatmul.mubr.f32.gmra.mxu0 %v29
    %v102 = vpop.f32.mrf.mxu0
    %v103 = vadd.f32 0.0, %v102
    %v104 = vpop.f32.mrf.mxu0
    %105 = vdwg.mxu0
    %v106 = vld [vmem:[%s0] sm:$0xff]
    %v108 = vcombine.high %v106, %v106
    %vm109 = vcmask 31744
    %v111 = vsel %vm109, %v98, 0
    %vm113 = vcmask 1043456
    %v114 = vsel %vm113, %v106, 0
    %v116 = vsel %vm113, %v108, 0
    %118 = vmatprep.subr.mxu0 0.0
    %119 = vmatpush1.msra.mxu0 0.0
    %120 = vmatprep.subr.mxu0 0.0
    %121 = vmatpush1.msra.mxu0 0.0
    %122 = vmatprep.subr.mxu0 0.0
    %123 = vmatpush1.msra.mxu0 0.0
    %124 = vmatprep.subr.mxu0 0.0
    %125 = vmatpush1.msra.mxu0 0.0
    %126 = vmatprep.subr.mxu0 0.0
    %127 = vmatpush1.msra.mxu0 0.0
    %128 = vmatprep.subr.mxu0 0.0
    %129 = vmatpush1.msra.mxu0 0.0
    %130 = vmatprep.subr.mxu0 0.0
    %131 = vmatpush1.msra.mxu0 0.0
    %132 = vmatprep.subr.mxu0 0.0
    %133 = vmatpush1.msra.mxu0 0.0
    %134 = vmatprep.subr.mxu0 0.0
    %135 = vmatpush1.msra.mxu0 0.0
    %136 = vmatprep.subr.mxu0 0.0
    %137 = vmatpush1.msra.mxu0 0.0
    %138 = vmatprep.subr.mxu0 0.0
    %139 = vmatpush1.msra.mxu0 0.0
    %140 = vmatprep.subr.mxu0 0.0
    %141 = vmatpush1.msra.mxu0 0.0
    %142 = vmatprep.subr.mxu0 0.0
    %143 = vmatpush1.msra.mxu0 0.0
    %144 = vmatprep.subr.mxu0 0.0
    %145 = vmatpush1.msra.mxu0 0.0
    %146 = vmatprep.subr.mxu0 0.0
    %147 = vmatpush1.msra.mxu0 0.0
    %148 = vmatprep.subr.mxu0 %v116
    %149 = vmatpush1.msra.mxu0 %v114
    %150 = vmatprep.subr.mxu0 0.0
    %151 = vmatpush2.msra.mxu0 0.0
    %152 = vmatprep.subr.mxu0 0.0
    %153 = vmatpush2.msra.mxu0 0.0
    %154 = vmatprep.subr.mxu0 0.0
    %155 = vmatpush2.msra.mxu0 0.0
    %156 = vmatprep.subr.mxu0 0.0
    %157 = vmatpush2.msra.mxu0 0.0
    %158 = vmatprep.subr.mxu0 0.0
    %159 = vmatpush2.msra.mxu0 0.0
    %160 = vmatprep.subr.mxu0 0.0
    %161 = vmatpush2.msra.mxu0 0.0
    %162 = vmatprep.subr.mxu0 0.0
    %163 = vmatpush2.msra.mxu0 0.0
    %164 = vmatprep.subr.mxu0 0.0
    %165 = vmatpush2.msra.mxu0 0.0
    %166 = vmatprep.subr.mxu0 0.0
    %167 = vmatpush2.msra.mxu0 0.0
    %168 = vmatprep.subr.mxu0 0.0
    %169 = vmatpush2.msra.mxu0 0.0
    %170 = vmatprep.subr.mxu0 0.0
    %171 = vmatpush2.msra.mxu0 0.0
    %172 = vmatprep.subr.mxu0 0.0
    %173 = vmatpush2.msra.mxu0 0.0
    %174 = vmatprep.subr.mxu0 0.0
    %175 = vmatpush2.msra.mxu0 0.0
    %176 = vmatprep.subr.mxu0 0.0
    %177 = vmatpush2.msra.mxu0 0.0
    %178 = vmatprep.subr.mxu0 0.0
    %179 = vmatpush2.msra.mxu0 0.0
    %180 = vmatprep.subr.mxu0 0.0
    %181 = vmatpush2.msra.mxu0 0.0
    %182 = vmatprep.mubr.f32.mxu0 0.0
    %183 = vmatmul.mubr.f32.gmra.mxu0 %v111
    %v184 = vpop.f32.mrf.mxu0
    %v185 = vadd.f32 0.0, %v184
    %v186 = vpop.f32.mrf.mxu0
    %v187 = vadd.f32 0.0, %v186
    %188 = vdwg.mxu0
    %v189 = vrot.slane %v185, 4
    %v190 = vmax.f32 %v185, %v189
    %v191 = vrot.slane %v190, 2
    %v192 = vmax.f32 %v190, %v191
    %v193 = vrot.slane %v192, 1
    %v194 = vmax.f32 %v192, %v193
    %v195 = vrot.slane %v187, 4
    %v196 = vmax.f32 %v187, %v195
    %v197 = vrot.slane %v196, 2
    %v198 = vmax.f32 %v196, %v197
    %v199 = vrot.slane %v198, 1
    %v200 = vmax.f32 %v198, %v199
    %v201 = vsub.f32 %v185, %v194
    %v202 = vsub.f32 %v187, %v200
    %v203 = vmul.f32 %v201, 1.442695
    %v204 = vpow.pop %v203
    %v205 = vmul.f32 %v202, 1.442695
    %v206 = vpow.pop %v205
    %v207 = vrot.slane %v204, 4
    %v208 = vadd.f32 %v204, %v207
    %v209 = vrot.slane %v208, 2
    %v210 = vadd.f32 %v208, %v209
    %v211 = vrot.slane %v210, 1
    %v212 = vadd.f32 %v210, %v211
    %v213 = vrot.slane %v206, 4
    %v214 = vadd.f32 %v206, %v213
    %v215 = vrot.slane %v214, 2
    %v216 = vadd.f32 %v214, %v215
    %v217 = vrot.slane %v216, 1
    %v218 = vadd.f32 %v216, %v217
    %219 = vset.pattern.permute.xlu0 4
    %220 = vperm.xlu0 %219, %v98
    %v221 = vpop.permute.xlu0 %220
    %v223 = vmul.f32 %v221, %v204
    %v224 = vmul.f32 %v221, %v206
    %v225 = vrot.slane %v223, 4
    %v226 = vadd.f32 %v223, %v225
    %v227 = vrot.slane %v226, 2
    %v228 = vadd.f32 %v226, %v227
    %v229 = vrot.slane %v228, 1
    %v230 = vadd.f32 %v228, %v229
    %v231 = vrot.slane %v224, 4
    %v232 = vadd.f32 %v224, %v231
    %v233 = vrot.slane %v232, 2
    %v234 = vadd.f32 %v232, %v233
    %v235 = vrot.slane %v234, 1
    %v236 = vadd.f32 %v234, %v235
    %v237 = vrcp.pop %v212
    %v238 = vrcp.pop %v218
    %v239 = vmul.f32 %v230, %v237
    %v240 = vmul.f32 %v236, %v238
    %s241 = scalar_lea.vmem %s0, 8
    %v242 = vld [vmem:[%s241] sm:$0xff]
    %v244 = vcombine.high %v242, %v242
    %v246 = vsel %vm109, %v103, 0
    %v248 = vsel %vm113, %v242, 0
    %v250 = vsel %vm113, %v244, 0
    %252 = vmatprep.subr.mxu0 0.0
    %253 = vmatpush1.msra.mxu0 0.0
    %254 = vmatprep.subr.mxu0 0.0
    %255 = vmatpush1.msra.mxu0 0.0
    %256 = vmatprep.subr.mxu0 0.0
    %257 = vmatpush1.msra.mxu0 0.0
    %258 = vmatprep.subr.mxu0 0.0
    %259 = vmatpush1.msra.mxu0 0.0
    %260 = vmatprep.subr.mxu0 0.0
    %261 = vmatpush1.msra.mxu0 0.0
    %262 = vmatprep.subr.mxu0 0.0
    %263 = vmatpush1.msra.mxu0 0.0
    %264 = vmatprep.subr.mxu0 0.0
    %265 = vmatpush1.msra.mxu0 0.0
    %266 = vmatprep.subr.mxu0 0.0
    %267 = vmatpush1.msra.mxu0 0.0
    %268 = vmatprep.subr.mxu0 0.0
    %269 = vmatpush1.msra.mxu0 0.0
    %270 = vmatprep.subr.mxu0 0.0
    %271 = vmatpush1.msra.mxu0 0.0
    %272 = vmatprep.subr.mxu0 0.0
    %273 = vmatpush1.msra.mxu0 0.0
    %274 = vmatprep.subr.mxu0 0.0
    %275 = vmatpush1.msra.mxu0 0.0
    %276 = vmatprep.subr.mxu0 0.0
    %277 = vmatpush1.msra.mxu0 0.0
    %278 = vmatprep.subr.mxu0 0.0
    %279 = vmatpush1.msra.mxu0 0.0
    %280 = vmatprep.subr.mxu0 0.0
    %281 = vmatpush1.msra.mxu0 0.0
    %282 = vmatprep.subr.mxu0 %v250
    %283 = vmatpush1.msra.mxu0 %v248
    %284 = vmatprep.subr.mxu0 0.0
    %285 = vmatpush2.msra.mxu0 0.0
    %286 = vmatprep.subr.mxu0 0.0
    %287 = vmatpush2.msra.mxu0 0.0
    %288 = vmatprep.subr.mxu0 0.0
    %289 = vmatpush2.msra.mxu0 0.0
    %290 = vmatprep.subr.mxu0 0.0
    %291 = vmatpush2.msra.mxu0 0.0
    %292 = vmatprep.subr.mxu0 0.0
    %293 = vmatpush2.msra.mxu0 0.0
    %294 = vmatprep.subr.mxu0 0.0
    %295 = vmatpush2.msra.mxu0 0.0
    %296 = vmatprep.subr.mxu0 0.0
    %297 = vmatpush2.msra.mxu0 0.0
    %298 = vmatprep.subr.mxu0 0.0
    %299 = vmatpush2.msra.mxu0 0.0
    %300 = vmatprep.subr.mxu0 0.0
    %301 = vmatpush2.msra.mxu0 0.0
    %302 = vmatprep.subr.mxu0 0.0
    %303 = vmatpush2.msra.mxu0 0.0
    %304 = vmatprep.subr.mxu0 0.0
    %305 = vmatpush2.msra.mxu0 0.0
    %306 = vmatprep.subr.mxu0 0.0
    %307 = vmatpush2.msra.mxu0 0.0
    %308 = vmatprep.subr.mxu0 0.0
    %309 = vmatpush2.msra.mxu0 0.0
    %310 = vmatprep.subr.mxu0 0.0
    %311 = vmatpush2.msra.mxu0 0.0
    %312 = vmatprep.subr.mxu0 0.0
    %313 = vmatpush2.msra.mxu0 0.0
    %314 = vmatprep.subr.mxu0 0.0
    %315 = vmatpush2.msra.mxu0 0.0
    %316 = vmatprep.mubr.f32.mxu0 0.0
    %317 = vmatmul.mubr.f32.gmra.mxu0 %v246
    %v318 = vpop.f32.mrf.mxu0
    %v319 = vadd.f32 0.0, %v318
    %v320 = vpop.f32.mrf.mxu0
    %v321 = vadd.f32 0.0, %v320
    %322 = vdwg.mxu0
    %v323 = vrot.slane %v319, 4
    %v324 = vmax.f32 %v319, %v323
    %v325 = vrot.slane %v324, 2
    %v326 = vmax.f32 %v324, %v325
    %v327 = vrot.slane %v326, 1
    %v328 = vmax.f32 %v326, %v327
    %v329 = vrot.slane %v321, 4
    %v330 = vmax.f32 %v321, %v329
    %v331 = vrot.slane %v330, 2
    %v332 = vmax.f32 %v330, %v331
    %v333 = vrot.slane %v332, 1
    %v334 = vmax.f32 %v332, %v333
    %v335 = vsub.f32 %v319, %v328
    %v336 = vsub.f32 %v321, %v334
    %v337 = vmul.f32 %v335, 1.442695
    %v338 = vpow.pop %v337
    %v339 = vmul.f32 %v336, 1.442695
    %v340 = vpow.pop %v339
    %v341 = vrot.slane %v338, 4
    %v342 = vadd.f32 %v338, %v341
    %v343 = vrot.slane %v342, 2
    %v344 = vadd.f32 %v342, %v343
    %v345 = vrot.slane %v344, 1
    %v346 = vadd.f32 %v344, %v345
    %v347 = vrot.slane %v340, 4
    %v348 = vadd.f32 %v340, %v347
    %v349 = vrot.slane %v348, 2
    %v350 = vadd.f32 %v348, %v349
    %v351 = vrot.slane %v350, 1
    %v352 = vadd.f32 %v350, %v351
    %353 = vset.pattern.permute.xlu0 4
    %354 = vperm.xlu0 %353, %v103
    %v355 = vpop.permute.xlu0 %354
    %v357 = vmul.f32 %v355, %v338
    %v358 = vmul.f32 %v355, %v340
    %v359 = vrot.slane %v357, 4
    %v360 = vadd.f32 %v357, %v359
    %v361 = vrot.slane %v360, 2
    %v362 = vadd.f32 %v360, %v361
    %v363 = vrot.slane %v362, 1
    %v364 = vadd.f32 %v362, %v363
    %v365 = vrot.slane %v358, 4
    %v366 = vadd.f32 %v358, %v365
    %v367 = vrot.slane %v366, 2
    %v368 = vadd.f32 %v366, %v367
    %v369 = vrot.slane %v368, 1
    %v370 = vadd.f32 %v368, %v369
    %v371 = vrcp.pop %v346
    %v372 = vrcp.pop %v352
    %v373 = vmul.f32 %v364, %v371
    %v374 = vmul.f32 %v370, %v372
    %vm375 = vcmask 1040384
    %v376 = vsel %vm375, %v239, %v373
    %v377 = vsel %vm375, %v240, %v374
    %v378 = vld [vmem:[%s3] sm:$0xff]
    %v379 = vld [vmem:[%s3 + $0x8] sm:$0xff]
    %v380 = vld [vmem:[%s3 + $0x10] sm:$0xff]
    %v381 = vld [vmem:[%s3 + $0x18] sm:$0xff]
    %v382 = vld [vmem:[%s3 + $0x20] sm:$0xff]
    %v383 = vld [vmem:[%s3 + $0x28] sm:$0xff]
    %v384 = vld [vmem:[%s3 + $0x30] sm:$0xff]
    %v385 = vld [vmem:[%s3 + $0x38] sm:$0xff]
    %v386 = vld [vmem:[%s3 + $0x40] sm:$0xff]
    %v387 = vld [vmem:[%s3 + $0x48] sm:$0xff]
    %v388 = vld [vmem:[%s3 + $0x50] sm:$0xff]
    %v389 = vld [vmem:[%s3 + $0x58] sm:$0xff]
    %v390 = vld [vmem:[%s3 + $0x60] sm:$0xff]
    %v391 = vld [vmem:[%s3 + $0x68] sm:$0xff]
    %v392 = vld [vmem:[%s3 + $0x70] sm:$0xff]
    %v393 = vld [vmem:[%s3 + $0x78] sm:$0xff]
    %v394 = vld [vmem:[%s3 + $0x80] sm:$0xff]
    %v395 = vld [vmem:[%s3 + $0x88] sm:$0xff]
    %v396 = vld [vmem:[%s3 + $0x90] sm:$0xff]
    %v397 = vld [vmem:[%s3 + $0x98] sm:$0xff]
    %v398 = vld [vmem:[%s3 + $0xa0] sm:$0xff]
    %v399 = vld [vmem:[%s3 + $0xa8] sm:$0xff]
    %v400 = vld [vmem:[%s3 + $0xb0] sm:$0xff]
    %v401 = vld [vmem:[%s3 + $0xb8] sm:$0xff]
    %v402 = vld [vmem:[%s3 + $0xc0] sm:$0xff]
    %v403 = vld [vmem:[%s3 + $0xc8] sm:$0xff]
    %v404 = vld [vmem:[%s3 + $0xd0] sm:$0xff]
    %v405 = vld [vmem:[%s3 + $0xd8] sm:$0xff]
    %v406 = vld [vmem:[%s3 + $0xe0] sm:$0xff]
    %v407 = vld [vmem:[%s3 + $0xe8] sm:$0xff]
    %v408 = vld [vmem:[%s3 + $0xf0] sm:$0xff]
    %v409 = vld [vmem:[%s3 + $0xf8] sm:$0xff]
    %v410 = vld [vmem:[%s3 + $0x100] sm:$0x1]
    %v411 = vlaneseq
    %v412 = vshrl.u32 %v411, 7
    %v413 = vsub.s32 0, %v412
    %v414 = vrot.slane %v410, %v413
    %415 = vmatprep.subr.mxu0 0.0
    %416 = vmatpush1.msra.mxu0 %v393
    %417 = vmatprep.subr.mxu0 0.0
    %418 = vmatpush1.msra.mxu0 %v392
    %419 = vmatprep.subr.mxu0 0.0
    %420 = vmatpush1.msra.mxu0 %v391
    %421 = vmatprep.subr.mxu0 0.0
    %422 = vmatpush1.msra.mxu0 %v390
    %423 = vmatprep.subr.mxu0 0.0
    %424 = vmatpush1.msra.mxu0 %v389
    %425 = vmatprep.subr.mxu0 0.0
    %426 = vmatpush1.msra.mxu0 %v388
    %427 = vmatprep.subr.mxu0 0.0
    %428 = vmatpush1.msra.mxu0 %v387
    %429 = vmatprep.subr.mxu0 0.0
    %430 = vmatpush1.msra.mxu0 %v386
    %431 = vmatprep.subr.mxu0 0.0
    %432 = vmatpush1.msra.mxu0 %v385
    %433 = vmatprep.subr.mxu0 0.0
    %434 = vmatpush1.msra.mxu0 %v384
    %435 = vmatprep.subr.mxu0 0.0
    %436 = vmatpush1.msra.mxu0 %v383
    %437 = vmatprep.subr.mxu0 0.0
    %438 = vmatpush1.msra.mxu0 %v382
    %439 = vmatprep.subr.mxu0 0.0
    %440 = vmatpush1.msra.mxu0 %v381
    %441 = vmatprep.subr.mxu0 0.0
    %442 = vmatpush1.msra.mxu0 %v380
    %443 = vmatprep.subr.mxu0 0.0
    %444 = vmatpush1.msra.mxu0 %v379
    %445 = vmatprep.subr.mxu0 0.0
    %446 = vmatpush1.msra.mxu0 %v378
    %447 = vmatprep.subr.mxu0 0.0
    %448 = vmatpush2.msra.mxu0 %v409
    %449 = vmatprep.subr.mxu0 0.0
    %450 = vmatpush2.msra.mxu0 %v408
    %451 = vmatprep.subr.mxu0 0.0
    %452 = vmatpush2.msra.mxu0 %v407
    %453 = vmatprep.subr.mxu0 0.0
    %454 = vmatpush2.msra.mxu0 %v406
    %455 = vmatprep.subr.mxu0 0.0
    %456 = vmatpush2.msra.mxu0 %v405
    %457 = vmatprep.subr.mxu0 0.0
    %458 = vmatpush2.msra.mxu0 %v404
    %459 = vmatprep.subr.mxu0 0.0
    %460 = vmatpush2.msra.mxu0 %v403
    %461 = vmatprep.subr.mxu0 0.0
    %462 = vmatpush2.msra.mxu0 %v402
    %463 = vmatprep.subr.mxu0 0.0
    %464 = vmatpush2.msra.mxu0 %v401
    %465 = vmatprep.subr.mxu0 0.0
    %466 = vmatpush2.msra.mxu0 %v400
    %467 = vmatprep.subr.mxu0 0.0
    %468 = vmatpush2.msra.mxu0 %v399
    %469 = vmatprep.subr.mxu0 0.0
    %470 = vmatpush2.msra.mxu0 %v398
    %471 = vmatprep.subr.mxu0 0.0
    %472 = vmatpush2.msra.mxu0 %v397
    %473 = vmatprep.subr.mxu0 0.0
    %474 = vmatpush2.msra.mxu0 %v396
    %475 = vmatprep.subr.mxu0 0.0
    %476 = vmatpush2.msra.mxu0 %v395
    %477 = vmatprep.subr.mxu0 0.0
    %478 = vmatpush2.msra.mxu0 %v394
    %479 = vmatprep.mubr.f32.mxu0 %v377
    %480 = vmatmul.mubr.f32.gmra.mxu0 %v376
    %v481 = vpop.f32.mrf.mxu0
    %v482 = vadd.f32 %v414, %v481
    %v483 = vpop.f32.mrf.mxu0
    %484 = vdwg.mxu0
    %vm485 = vcmask 58368
    %486 = vst.msk [vmem:[#allocation2] sm:$0x3] %vm485, %v482
    // Predicated region
    $region18: #{tpu_custom_call.1} parent=1 // pred_check
      _
    $region19: #{tpu_custom_call.1} parent=1 // pred_check_branch
      %488 = sbr.rel (0) target = $region21
    $region20: #{tpu_custom_call.1} parent=1 // pred_region
      %s490 = ssub.s32 32, 32
      %491 = vsyncadd [#allocation3], %s490
      %s493 = sshll.u32 [#allocation2], 4
      %s494 = int_to_ptr.vmem [resolvable:$true] %s493
      %496 = dma.vmem_to_hbm [thread:$0]  %s494, 32, %s4, [#allocation3]
    $region21: #{tpu_custom_call.1} parent=1 // pred_fallthru
      _
    // Predicated region
    $region22: #{tpu_custom_call.1} parent=1 // pred_check
      _
    $region23: #{tpu_custom_call.1} parent=1 // pred_check_branch
      %498 = sbr.rel (0) target = $region25
    $region24: #{tpu_custom_call.1} parent=1 // pred_region
      %499 = dma.done [#allocation3], 32
    $region25: #{tpu_custom_call.1} parent=1 // pred_fallthru
      _
    %500 = vsyncpa [#allocation3], 1

</llo_original>
